<compile_context>
chip_gen: v5e
topology: v5e:2x2
jax: 0.10.0
libtpu: 0.0.40
codegen_flags: <defaults>
</compile_context>

<pallas_src>
import jax
import jax.numpy as jnp
from jax.experimental import pallas as pl
from jax.experimental.pallas import tpu as pltpu


def _round_up(x: int, m: int) -> int:
    return (x + m - 1) // m * m


# ---------------------------------------------------------------------------
# Kernel bodies
# ---------------------------------------------------------------------------
def _linact_fused_kernel(x_ref, w_ref, b_ref, o_ref):
    """Whole K in one tile: y = relu(x @ w + b), no scratch accumulator."""
    y = jnp.dot(x_ref[...], w_ref[...], preferred_element_type=jnp.float32)
    y = y + b_ref[...].astype(jnp.float32)
    o_ref[...] = jnp.maximum(y, 0.0).astype(o_ref.dtype)


def _linact_acc_kernel(x_ref, w_ref, b_ref, o_ref, acc_ref):
    """K-tiled reduction with a resident f32 accumulator in VMEM."""
    k = pl.program_id(2)
    partial = jnp.dot(x_ref[...], w_ref[...], preferred_element_type=jnp.float32)

    @pl.when(k == 0)
    def _():
        acc_ref[...] = partial          # direct store: saves the zero-init pass

    @pl.when(k > 0)
    def _():
        acc_ref[...] += partial

    @pl.when(k == pl.num_programs(2) - 1)
    def _():
        y = acc_ref[...] + b_ref[...].astype(jnp.float32)
        o_ref[...] = jnp.maximum(y, 0.0).astype(o_ref.dtype)


# ---------------------------------------------------------------------------
# Wrapper
# ---------------------------------------------------------------------------
def linact(x, weight, bias, *, do_prob=0.0, compute_dtype=jnp.bfloat16,
           tm=512, tn=512, tk=1024,
           resident_weight_bytes=16 << 20, vmem_budget_bytes=40 << 20):
    """y = relu(x @ weight.T + bias); x: (..., n_in), weight: (n_out, n_in)."""
    if do_prob != 0.0:
        # TODO(synk): training-mode dropout (do_prob > 0) would use
        # pltpu.prng_seed + pltpu.prng_random_bits; module default is 0.
        raise NotImplementedError("dropout with do_prob > 0 is not implemented")

    *lead, n_in = x.shape
    n_out = weight.shape[0]
    assert weight.shape == (n_out, n_in) and bias.shape == (n_out,)

    m = 1
    for d in lead:
        m *= d

    out_dtype = x.dtype
    itemsize = jnp.dtype(compute_dtype).itemsize
    out_itemsize = jnp.dtype(out_dtype).itemsize
    # Sublane granularity of the packed (sub, 128) vreg tile for compute_dtype.
    sub = {4: 8, 2: 16, 1: 32}[itemsize]

    # bf16 MXU path: cast once; pre-transpose the weight to (K, N) so the
    # kernel contraction is ((1,),(0,)) with no per-step XLU transpose.
    x2d = x.reshape(m, n_in).astype(compute_dtype)
    w_t = weight.T.astype(compute_dtype)            # (n_in, n_out)
    b2d = bias.reshape(1, n_out)

    cost = pl.CostEstimate(
        flops=2 * m * n_in * n_out,
        transcendentals=0,
        bytes_accessed=(m * n_in + n_in * n_out) * itemsize
                       + (n_out + m * n_out) * out_itemsize,
    )

    tm = max(sub, min(tm, _round_up(m, sub)))
    w_bytes = n_in * n_out * itemsize

    # ---- Path A: weight held VMEM-resident, grid over M only. --------------
    if w_bytes <= resident_weight_bytes:
        tm_a = tm

        def need_a(t):
            return (2 * t * n_in * itemsize            # x (double-buffered)
                    + 2 * w_bytes                       # weight (+ slack)
                    + 2 * n_out * out_itemsize          # bias
                    + 2 * t * n_out * out_itemsize)     # output

        while need_a(tm_a) > vmem_budget_bytes and tm_a > sub:
            tm_a = max(sub, tm_a // 2)

        if need_a(tm_a) <= vmem_budget_bytes:
            vmem_limit = min(need_a(tm_a) + (8 << 20), 56 << 20)
            out2d = pl.pallas_call(
                _linact_fused_kernel,
                out_shape=jax.ShapeDtypeStruct((m, n_out), out_dtype),
                grid_spec=pltpu.PrefetchScalarGridSpec(
                    num_scalar_prefetch=0,
                    grid=(pl.cdiv(m, tm_a),),
                    in_specs=[
                        pl.BlockSpec((tm_a, n_in), lambda i: (i, 0)),
                        pl.BlockSpec((n_in, n_out), lambda i: (0, 0)),  # resident
                        pl.BlockSpec((1, n_out), lambda i: (0, 0)),
                    ],
                    out_specs=pl.BlockSpec((tm_a, n_out), lambda i: (i, 0)),
                ),
                compiler_params=pltpu.CompilerParams(
                    dimension_semantics=("parallel",),
                    vmem_limit_bytes=vmem_limit,
                ),
                cost_estimate=cost,
            )(x2d, w_t, b2d)
            return out2d.reshape(*lead, n_out)
        # else: fall through to the tiled path

    # ---- Path B: tiled over (M, N[, K]). -----------------------------------
    tn = max(128, min(tn, _round_up(n_out, 128)))

    if n_in <= tk:
        tk = n_in            # full K extent in one block -> no padding needed
        kp = n_in
        single_k = True
    else:
        tk = _round_up(tk, 128)
        kp = _round_up(n_in, tk)
        single_k = False

    def need_b(tm_, tn_, tk_):
        n = (2 * (tm_ * tk_ + tk_ * tn_) * itemsize
             + 2 * tn_ * out_itemsize
             + 2 * tm_ * tn_ * out_itemsize)
        if not single_k:
            n += tm_ * tn_ * 4           # resident f32 accumulator
        return n

    while need_b(tm, tn, tk) > vmem_budget_bytes and (tn > 128 or tm > sub):
        if tn > 128:
            tn //= 2
        else:
            tm = max(sub, tm // 2)

    # Only the reduction (K) dim ever needs zero-padding for correctness;
    # partial M/N tail blocks are handled by masked output stores.
    if kp != n_in:
        x2d = jnp.pad(x2d, ((0, 0), (0, kp - n_in)))
        w_t = jnp.pad(w_t, ((0, kp - n_in), (0, 0)))

    vmem_limit = min(need_b(tm, tn, tk) + (8 << 20), 56 << 20)

    if single_k:
        out2d = pl.pallas_call(
            _linact_fused_kernel,
            out_shape=jax.ShapeDtypeStruct((m, n_out), out_dtype),
            grid_spec=pltpu.PrefetchScalarGridSpec(
                num_scalar_prefetch=0,
                grid=(pl.cdiv(m, tm), pl.cdiv(n_out, tn)),
                in_specs=[
                    pl.BlockSpec((tm, tk), lambda i, j: (i, 0)),
                    pl.BlockSpec((tk, tn), lambda i, j: (0, j)),
                    pl.BlockSpec((1, tn), lambda i, j: (0, j)),
                ],
                out_specs=pl.BlockSpec((tm, tn), lambda i, j: (i, j)),
            ),
            compiler_params=pltpu.CompilerParams(
                dimension_semantics=("parallel", "parallel"),
                vmem_limit_bytes=vmem_limit,
            ),
            cost_estimate=cost,
        )(x2d, w_t, b2d)
    else:
        out2d = pl.pallas_call(
            _linact_acc_kernel,
            out_shape=jax.ShapeDtypeStruct((m, n_out), out_dtype),
            grid_spec=pltpu.PrefetchScalarGridSpec(
                num_scalar_prefetch=0,
                grid=(pl.cdiv(m, tm), pl.cdiv(n_out, tn), kp // tk),
                in_specs=[
                    pl.BlockSpec((tm, tk), lambda i, j, k: (i, k)),
                    pl.BlockSpec((tk, tn), lambda i, j, k: (k, j)),
                    pl.BlockSpec((1, tn), lambda i, j, k: (0, j)),
                ],
                out_specs=pl.BlockSpec((tm, tn), lambda i, j, k: (i, j)),
                scratch_shapes=[pltpu.VMEM((tm, tn), jnp.float32)],
            ),
            compiler_params=pltpu.CompilerParams(
                dimension_semantics=("parallel", "parallel", "arbitrary"),
                vmem_limit_bytes=vmem_limit,
            ),
            cost_estimate=cost,
        )(x2d, w_t, b2d)

    return out2d.reshape(*lead, n_out)


if __name__ == "__main__":
    key = jax.random.PRNGKey(0)
    kx, kw, kb = jax.random.split(key, 3)

    batch, seq, n_in, n_out = 2, 8, 32, 32
    x = jax.random.normal(kx, (batch, seq, n_in), dtype=jnp.float32)

    # Deterministic params mimicking nn.Linear init: U(-1/sqrt(n_in), 1/sqrt(n_in))
    bound = 1.0 / (n_in ** 0.5)
    weight = jax.random.uniform(kw, (n_out, n_in), minval=-bound, maxval=bound,
                                dtype=jnp.float32)
    bias = jax.random.uniform(kb, (n_out,), minval=-bound, maxval=bound,
                              dtype=jnp.float32)

    y = jax.block_until_ready(linact(x, weight, bias))

    # Reference in plain JAX at the same (bf16 in, f32 accumulate) precision.
    xr = x.astype(jnp.bfloat16).astype(jnp.float32)
    wr = weight.astype(jnp.bfloat16).astype(jnp.float32)
    y_ref = jnp.maximum(jnp.einsum("bsi,oi->bso", xr, wr) + bias, 0.0)

    assert y.shape == (batch, seq, n_out)
    assert jnp.allclose(y, y_ref, atol=1e-4, rtol=1e-4), \
        float(jnp.max(jnp.abs(y - y_ref)))

    print("KERNEL_OK")
</pallas_src>

<mosaic_0001>
module attributes {stable_mosaic.version = 11 : i64} {
  func.func @_linact_fused_kernel(%arg0: i32, %arg1: memref<16x32xbf16, #tpu.memory_space<vmem>>, %arg2: memref<32x32xbf16, #tpu.memory_space<vmem>>, %arg3: memref<1x32xf32, #tpu.memory_space<vmem>>, %arg4: memref<16x32xf32, #tpu.memory_space<vmem>>) attributes {dimension_semantics = [#tpu.dimension_semantics<parallel>], iteration_bounds = array<i64: 1>, scalar_prefetch = 0 : i64, scratch_operands = 0 : i64, tpu.core_type = #tpu.core_type<tc>, window_params = [{transform_indices = @transform_0, window_bounds = array<i64: 16, 32>}, {pipeline_mode = #tpu.pipeline_mode<synchronous>, transform_indices = @transform_1, window_bounds = array<i64: 32, 32>}, {pipeline_mode = #tpu.pipeline_mode<synchronous>, transform_indices = @transform_2, window_bounds = array<i64: 1, 32>}, {transform_indices = @transform_3, window_bounds = array<i64: 16, 32>}]} {
    %c0 = arith.constant 0 : index
    %c0_0 = arith.constant 0 : index
    %0 = vector.load %arg1[%c0, %c0_0] : memref<16x32xbf16, #tpu.memory_space<vmem>>, vector<16x32xbf16>
    %c0_1 = arith.constant 0 : index
    %c0_2 = arith.constant 0 : index
    %1 = vector.load %arg2[%c0_1, %c0_2] : memref<32x32xbf16, #tpu.memory_space<vmem>>, vector<32x32xbf16>
    %cst = arith.constant dense<0.000000e+00> : vector<16x32xf32>
    %2 = tpu.matmul %0, %1, %cst {dimension_numbers = #tpu.dot_dimension_numbers<[1], [0], [0], [1], [0, 0, 1, 1], [], []>} : vector<16x32xbf16>, vector<32x32xbf16>, vector<16x32xf32> -> vector<16x32xf32>
    %c0_3 = arith.constant 0 : index
    %c0_4 = arith.constant 0 : index
    %3 = vector.load %arg3[%c0_3, %c0_4] : memref<1x32xf32, #tpu.memory_space<vmem>>, vector<1x32xf32>
    %4 = vector.broadcast %3 : vector<1x32xf32> to vector<16x32xf32>
    %5 = arith.addf %2, %4 : vector<16x32xf32>
    %cst_5 = arith.constant 0.000000e+00 : f32
    %6 = vector.broadcast %cst_5 : f32 to vector<16x32xf32>
    %7 = arith.maximumf %5, %6 : vector<16x32xf32>
    %c0_6 = arith.constant 0 : index
    %c0_7 = arith.constant 0 : index
    %8 = vector.load %arg4[%c0_6, %c0_7] : memref<16x32xf32, #tpu.memory_space<vmem>>, vector<16x32xf32>
    tpu.vector_store %arg4[%c0_6, %c0_7], %7 {strides = array<i32>} : memref<16x32xf32, #tpu.memory_space<vmem>>, vector<16x32xf32>,
    return
  }
  func.func @transform_0(%arg0: i32) -> (i32, i32) {
    %c0_i32 = arith.constant 0 : i32
    %c0_i32_0 = arith.constant 0 : i32
    return %arg0, %c0_i32 : i32, i32
  }
  func.func @transform_1(%arg0: i32) -> (i32, i32) {
    %c0_i32 = arith.constant 0 : i32
    %c0_i32_0 = arith.constant 0 : i32
    %c0_i32_1 = arith.constant 0 : i32
    return %c0_i32, %c0_i32_0 : i32, i32
  }
  func.func @transform_2(%arg0: i32) -> (i32, i32) {
    %c0_i32 = arith.constant 0 : i32
    %c0_i32_0 = arith.constant 0 : i32
    %c0_i32_1 = arith.constant 0 : i32
    return %c0_i32, %c0_i32_0 : i32, i32
  }
  func.func @transform_3(%arg0: i32) -> (i32, i32) {
    %c0_i32 = arith.constant 0 : i32
    %c0_i32_0 = arith.constant 0 : i32
    return %arg0, %c0_i32 : i32, i32
  }
}

</mosaic_0001>

<llo_original>
// kernel: tpu_custom_call.1
$region0: #{tpu_custom_call.1}
  #allocation0 [shape = 'u32[]', space=smem, size = 0x4, offset = 0x4, fixed_abs, tag = 'smem constant byte address 0x4 - core index']
  #allocation1 [shape = 'u32[72,128]{1,0:T(1,128)}', space=vmem, size = 0x9000, scoped, tag = 'internal scratch']
  %s0 = inlined_call_operand.hbm [shape: bf16[16,32], index: 0, kind: input, shape index: {}]
  %s1 = inlined_call_operand.hbm [shape: bf16[32,32], index: 1, kind: input, shape index: {}]
  %s2 = inlined_call_operand.vmem [shape: f32[1,32], index: 2, kind: input, shape index: {}]
  %s3 = inlined_call_operand.hbm [shape: f32[16,32], index: 3, kind: output, shape index: {}]
  %s4 = sld [smem:[#allocation0]]
  $region30: #{tpu_custom_call.1} parent=0
    _
  %s6 = ssub.s32 1, %s4
  %s7 = scalar_select 0, %s6, %s4
  $region1: #{tpu_custom_call.1} parent=0
    #allocation2 [shape = 'u8[4096]{0}', space=vmem, size = 0x1000, scoped, tag = 'input window, operand 0, single buffered']
    #allocation3 [shape = 's32[1]{0}', space=sflag, size = 0x4, scoped, tag = 'scoped memory for tpu_custom_call.1']
    #allocation4 [shape = 's32[1]{0}', space=sflag, size = 0x4, scoped, tag = 'scoped memory for tpu_custom_call.1']
    #allocation5 [shape = 'u8[8192]{0}', space=vmem, size = 0x2000, scoped, tag = 'input window, operand 1, single buffered']
    #allocation6 [shape = 's32[1]{0}', space=sflag, size = 0x4, scoped, tag = 'scoped memory for tpu_custom_call.1']
    #allocation7 [shape = 'u8[8192]{0}', space=vmem, size = 0x2000, scoped, tag = 'output window, operand 0, single buffered']
    %8 = vsyncpa [#allocation3], 0
    %9 = vsyncpa [#allocation6], 0
    %10 = vsyncpa [#allocation4], 0
    // Predicated region
    $region2: #{tpu_custom_call.1} parent=1 // pred_check
      _
    $region3: #{tpu_custom_call.1} parent=1 // pred_check_branch
      %12 = sbr.rel (0) target = $region5
    $region4: #{tpu_custom_call.1} parent=1 // pred_region
      %14 = vsyncadd [#allocation3], 0
      %s15 = sshll.u32 %s0, 4
      %s16 = int_to_ptr.hbm [resolvable:$true] %s15
      %s17 = sshll.u32 [#allocation2], 4
      %s18 = int_to_ptr.vmem [resolvable:$true] %s17
      %23 = dma.hbm_to_vmem [thread:$0]  %s16, 128, %s18, [#allocation3], 64, 64, 4
    $region5: #{tpu_custom_call.1} parent=1 // pred_fallthru
      _
    // Predicated region
    $region6: #{tpu_custom_call.1} parent=1 // pred_check
      _
    $region7: #{tpu_custom_call.1} parent=1 // pred_check_branch
      %25 = sbr.rel (0) target = $region9
    $region8: #{tpu_custom_call.1} parent=1 // pred_region
      %27 = vsyncadd [#allocation6], 0
      %s28 = sshll.u32 %s1, 4
      %s29 = int_to_ptr.hbm [resolvable:$true] %s28
      %s30 = sshll.u32 [#allocation5], 4
      %s31 = int_to_ptr.vmem [resolvable:$true] %s30
      %36 = dma.hbm_to_vmem [thread:$0]  %s29, 256, %s31, [#allocation6], 64, 64, 4
    $region9: #{tpu_custom_call.1} parent=1 // pred_fallthru
      _
    // Predicated region
    $region10: #{tpu_custom_call.1} parent=1 // pred_check
      _
    $region11: #{tpu_custom_call.1} parent=1 // pred_check_branch
      %38 = sbr.rel (0) target = $region13
    $region12: #{tpu_custom_call.1} parent=1 // pred_region
      _
    $region13: #{tpu_custom_call.1} parent=1 // pred_fallthru
      _
    // Predicated region
    $region14: #{tpu_custom_call.1} parent=1 // pred_check
      _
    $region15: #{tpu_custom_call.1} parent=1 // pred_check_branch
      %40 = sbr.rel (0) target = $region17
    $region16: #{tpu_custom_call.1} parent=1 // pred_region
      %42 = dma.done [#allocation3], 128
    $region17: #{tpu_custom_call.1} parent=1 // pred_fallthru
      _
    // Predicated region
    $region18: #{tpu_custom_call.1} parent=1 // pred_check
      _
    $region19: #{tpu_custom_call.1} parent=1 // pred_check_branch
      %44 = sbr.rel (0) target = $region21
    $region20: #{tpu_custom_call.1} parent=1 // pred_region
      %46 = dma.done [#allocation6], 256
    $region21: #{tpu_custom_call.1} parent=1 // pred_fallthru
      _
    %v48 = vld [vmem:[#allocation2] sm:$0xf]
    %v49 = vld [vmem:[#allocation2 + $0x4] sm:$0xf]
    %v50 = vld [vmem:[#allocation5] sm:$0xf]
    %v51 = vld [vmem:[#allocation5 + $0x4] sm:$0xf]
    %v52 = vld [vmem:[#allocation5 + $0x8] sm:$0xf]
    %v53 = vld [vmem:[#allocation5 + $0xc] sm:$0xf]
    %v54 = vld [vmem:[%s2] sm:$0x1]
    %v56 = vperm.slane %v54, 0
    %v60 = vunpack.c.l.b16 %v48
    %v61 = vunpack.c.l.b16 %v49
    %v62 = vpack.c.b16 %v61, %v60
    %v67 = vunpack.c.l.b16 %v50
    %v68 = vunpack.c.l.b16 %v51
    %v69 = vunpack.c.l.b16 %v52
    %v70 = vunpack.c.l.b16 %v53
    %v71 = vpack.c.b16 %v68, %v67
    %v72 = vpack.c.b16 %v70, %v69
    %vm75 = vcmask 261120
    %v77 = vsel %vm75, %v62, 0
    %79 = vmatpush.bf16.msra.mxu0 0
    %80 = vmatpush.bf16.msra.mxu0 0
    %81 = vmatpush.bf16.msra.mxu0 0
    %82 = vmatpush.bf16.msra.mxu0 0
    %83 = vmatpush.bf16.msra.mxu0 0
    %84 = vmatpush.bf16.msra.mxu0 0
    %85 = vmatpush.bf16.msra.mxu0 %v72
    %86 = vmatpush.bf16.msra.mxu0 %v71
    %87 = vmatmul.bf16.gmra.mxu0 %v77
    %v88 = vpop.f32.mrf.mxu0
    %v89 = vadd.f32 %v56, %v88
    %v90 = vpop.f32.mrf.mxu0
    %v91 = vadd.f32 %v56, %v90
    %92 = vdwg.mxu0
    %v93 = vmax.f32 %v89, 0.0
    %v94 = vmax.f32 %v91, 0.0
    %95 = vst.msk [vmem:[#allocation7] sm:$0xff] %vm75, %v93
    %96 = vst.msk [vmem:[#allocation7 + $0x8] sm:$0xff] %vm75, %v94
    // Predicated region
    $region22: #{tpu_custom_call.1} parent=1 // pred_check
      _
    $region23: #{tpu_custom_call.1} parent=1 // pred_check_branch
      %98 = sbr.rel (0) target = $region25
    $region24: #{tpu_custom_call.1} parent=1 // pred_region
      %100 = vsyncadd [#allocation4], 0
      %s101 = sshll.u32 [#allocation7], 4
      %s102 = int_to_ptr.vmem [resolvable:$true] %s101
      %s103 = sshll.u32 %s3, 4
      %s104 = int_to_ptr.hbm [resolvable:$true] %s103
      %109 = dma.vmem_to_hbm [thread:$0]  %s102, 256, %s104, [#allocation4], 128, 128, 8
    $region25: #{tpu_custom_call.1} parent=1 // pred_fallthru
      _
    // Predicated region
    $region26: #{tpu_custom_call.1} parent=1 // pred_check
      _
    $region27: #{tpu_custom_call.1} parent=1 // pred_check_branch
      %111 = sbr.rel (0) target = $region29
    $region28: #{tpu_custom_call.1} parent=1 // pred_region
      %113 = dma.done [#allocation4], 256
    $region29: #{tpu_custom_call.1} parent=1 // pred_fallthru
      _
    %114 = vsyncpa [#allocation3], 1
    %115 = vsyncpa [#allocation6], 1
    %116 = vsyncpa [#allocation4], 1

</llo_original>
